<compile_context>
chip_gen: v7x
topology: tpu7x:2x2x1
jax: 0.10.0
libtpu: 0.0.40
codegen_flags: <defaults>
</compile_context>

<pallas_src>
import jax
import jax.numpy as jnp
from jax.experimental import pallas as pl
from jax.experimental.pallas import tpu as pltpu


def _msca_kernel(x_ref, w1_ref, s1_ref, b1_ref, w2_ref, s2_ref, b2_ref,
                 xg_ref, o_ref):
    # x_ref : (C, TS)      input tile: channels in sublanes, spatial in lanes
    # w1_ref: (Cm_pad, C)  first 1x1 conv weight (local branch)
    # s1/b1 : (Cm_pad, 1)  fused BN1 scale / shift
    # w2_ref: (C, Cm_pad)  second 1x1 conv weight
    # s2/b2 : (C, 1)       fused BN2 scale / shift
    # xg_ref: (C, 1)       per-sample global-branch output (broadcast over lanes)
    # o_ref : (C, TS)      sigmoid(local + global)
    x = x_ref[...]
    h = jnp.dot(w1_ref[...], x, preferred_element_type=jnp.float32)    # (Cm, TS)
    h = jnp.maximum(h * s1_ref[...] + b1_ref[...], 0.0)                # BN + ReLU
    y = jnp.dot(w2_ref[...], h, preferred_element_type=jnp.float32)    # (C, TS)
    y = y * s2_ref[...] + b2_ref[...] + xg_ref[...]                    # BN + global
    o_ref[...] = jax.nn.sigmoid(y).astype(o_ref.dtype)


def _fuse_bn(gamma, beta, mean, var, eps):
    # Conv2d(bias=False) + eval-mode BN:  y*scale + shift
    inv_std = 1.0 / jnp.sqrt(var + eps)
    scale = gamma * inv_std
    shift = beta - mean * scale
    return scale, shift


def msca_forward(x, params, *, eps=1e-5, tile_spatial=2048):
    """MSCA forward (eval-mode BN). x: (N, C, H, W) f32 -> wei: (N, C, H, W)."""
    N, C, H, W = x.shape
    HW = H * W
    (w1l, g1l, be1l, m1l, v1l,
     w2l, g2l, be2l, m2l, v2l,
     w1g, g1g, be1g, m1g, v1g,
     w2g, g2g, be2g, m2g, v2g) = params

    Cm = w1l.shape[0]
    w1l2 = w1l.reshape(Cm, C)
    w2l2 = w2l.reshape(C, Cm)
    w1g2 = w1g.reshape(Cm, C)
    w2g2 = w2g.reshape(C, Cm)

    s1l, t1l = _fuse_bn(g1l, be1l, m1l, v1l, eps)
    s2l, t2l = _fuse_bn(g2l, be2l, m2l, v2l, eps)
    s1g, t1g = _fuse_bn(g1g, be1g, m1g, v1g, eps)
    s2g, t2g = _fuse_bn(g2g, be2g, m2g, v2g, eps)

    # ---- global branch: tiny, runs on the (N, C) pooled vector only ----
    pooled = jnp.mean(x, axis=(2, 3))                          # AdaptiveAvgPool2d(1)
    hg = jnp.maximum(pooled @ w1g2.T * s1g + t1g, 0.0)         # (N, Cm)
    xg = hg @ w2g2.T * s2g + t2g                               # (N, C)
    xg = xg.reshape(N, C, 1)

    # ---- local branch + add + sigmoid: Pallas kernel over (N, C, H*W) ----
    x_flat = x.reshape(N, C, HW)          # pure view: NCHW already has HW last

    # lane-dense spatial tile (multiple of 128), padded spatial if needed
    ts = min(tile_spatial, ((HW + 127) // 128) * 128)
    hw_pad = pl.cdiv(HW, ts) * ts
    if hw_pad != HW:
        x_flat = jnp.pad(x_flat, ((0, 0), (0, 0), (0, hw_pad - HW)))

    # pad the hidden channel dim to a sublane multiple (cheap, weights only);
    # padded rows have zero weight/scale/shift so they contribute nothing.
    Cm_pad = ((Cm + 7) // 8) * 8
    if Cm_pad != Cm:
        w1l2 = jnp.pad(w1l2, ((0, Cm_pad - Cm), (0, 0)))
        w2l2 = jnp.pad(w2l2, ((0, 0), (0, Cm_pad - Cm)))
        s1l = jnp.pad(s1l, (0, Cm_pad - Cm))
        t1l = jnp.pad(t1l, (0, Cm_pad - Cm))

    s1c = s1l.reshape(Cm_pad, 1)
    t1c = t1l.reshape(Cm_pad, 1)
    s2c = s2l.reshape(C, 1)
    t2c = t2l.reshape(C, 1)

    grid = (N, hw_pad // ts)

    out_flat = pl.pallas_call(
        _msca_kernel,
        out_shape=jax.ShapeDtypeStruct((N, C, hw_pad), x.dtype),
        grid_spec=pltpu.PrefetchScalarGridSpec(
            num_scalar_prefetch=0,
            grid=grid,
            in_specs=[
                pl.BlockSpec((None, C, ts), lambda n, s: (n, 0, s)),   # x tile
                pl.BlockSpec((Cm_pad, C), lambda n, s: (0, 0)),        # W1
                pl.BlockSpec((Cm_pad, 1), lambda n, s: (0, 0)),        # BN1 scale
                pl.BlockSpec((Cm_pad, 1), lambda n, s: (0, 0)),        # BN1 shift
                pl.BlockSpec((C, Cm_pad), lambda n, s: (0, 0)),        # W2
                pl.BlockSpec((C, 1), lambda n, s: (0, 0)),             # BN2 scale
                pl.BlockSpec((C, 1), lambda n, s: (0, 0)),             # BN2 shift
                pl.BlockSpec((None, C, 1), lambda n, s: (n, 0, 0)),    # global xg
            ],
            out_specs=pl.BlockSpec((None, C, ts), lambda n, s: (n, 0, s)),
        ),
        compiler_params=pltpu.CompilerParams(
            dimension_semantics=("parallel", "parallel")),
    )(x_flat, w1l2, s1c, t1c, w2l2, s2c, t2c, xg)

    if hw_pad != HW:
        out_flat = out_flat[:, :, :HW]
    return out_flat.reshape(N, C, H, W)


def _reference(x, params, eps=1e-5):
    # Pure-JAX mirror of MSCA.forward (eval-mode BN).
    (w1l, g1l, be1l, m1l, v1l,
     w2l, g2l, be2l, m2l, v2l,
     w1g, g1g, be1g, m1g, v1g,
     w2g, g2g, be2g, m2g, v2g) = params

    def conv_bn(t, w, gamma, beta, mean, var, relu):
        y = jnp.einsum('nchw,oc->nohw', t, w.reshape(w.shape[0], w.shape[1]))
        y = (y - mean[None, :, None, None]) / jnp.sqrt(
            var[None, :, None, None] + eps)
        y = y * gamma[None, :, None, None] + beta[None, :, None, None]
        return jnp.maximum(y, 0.0) if relu else y

    xl = conv_bn(x, w1l, g1l, be1l, m1l, v1l, True)
    xl = conv_bn(xl, w2l, g2l, be2l, m2l, v2l, False)

    p = jnp.mean(x, axis=(2, 3), keepdims=True)
    xg = conv_bn(p, w1g, g1g, be1g, m1g, v1g, True)
    xg = conv_bn(xg, w2g, g2g, be2g, m2g, v2g, False)

    return jax.nn.sigmoid(xl + xg)


if __name__ == "__main__":
    key = jax.random.PRNGKey(0)
    N, C, H, W = 2, 4, 16, 16
    r = 2
    Cm = C // r

    keys = jax.random.split(key, 21)
    x = jax.random.normal(keys[0], (N, C, H, W), dtype=jnp.float32)

    def bn_params(kg, kb, km, kv, ch):
        gamma = 1.0 + 0.1 * jax.random.normal(kg, (ch,), dtype=jnp.float32)
        beta = 0.1 * jax.random.normal(kb, (ch,), dtype=jnp.float32)
        mean = 0.1 * jax.random.normal(km, (ch,), dtype=jnp.float32)
        var = jnp.abs(jax.random.normal(kv, (ch,), dtype=jnp.float32)) + 0.5
        return gamma, beta, mean, var

    w1l = 0.3 * jax.random.normal(keys[1], (Cm, C, 1, 1), dtype=jnp.float32)
    g1l, be1l, m1l, v1l = bn_params(keys[2], keys[3], keys[4], keys[5], Cm)
    w2l = 0.3 * jax.random.normal(keys[6], (C, Cm, 1, 1), dtype=jnp.float32)
    g2l, be2l, m2l, v2l = bn_params(keys[7], keys[8], keys[9], keys[10], C)
    w1g = 0.3 * jax.random.normal(keys[11], (Cm, C, 1, 1), dtype=jnp.float32)
    g1g, be1g, m1g, v1g = bn_params(keys[12], keys[13], keys[14], keys[15], Cm)
    w2g = 0.3 * jax.random.normal(keys[16], (C, Cm, 1, 1), dtype=jnp.float32)
    g2g, be2g, m2g, v2g = bn_params(keys[17], keys[18], keys[19], keys[20], C)

    params = (w1l, g1l, be1l, m1l, v1l,
              w2l, g2l, be2l, m2l, v2l,
              w1g, g1g, be1g, m1g, v1g,
              w2g, g2g, be2g, m2g, v2g)

    out = msca_forward(x, params)
    out = jax.block_until_ready(out)

    ref = _reference(x, params)
    assert out.shape == (N, C, H, W)
    assert jnp.allclose(out, ref, atol=1e-4, rtol=1e-4), \
        float(jnp.max(jnp.abs(out - ref)))

    print("KERNEL_OK")
</pallas_src>

<mosaic_0001>
module attributes {stable_mosaic.version = 11 : i64} {
  func.func @_msca_kernel(%arg0: i32, %arg1: i32, %arg2: memref<1x4x256xf32, #tpu.memory_space<vmem>>, %arg3: memref<8x4xf32, #tpu.memory_space<vmem>>, %arg4: memref<8x1xf32, #tpu.memory_space<vmem>>, %arg5: memref<8x1xf32, #tpu.memory_space<vmem>>, %arg6: memref<4x8xf32, #tpu.memory_space<vmem>>, %arg7: memref<4x1xf32, #tpu.memory_space<vmem>>, %arg8: memref<4x1xf32, #tpu.memory_space<vmem>>, %arg9: memref<1x4x1xf32, #tpu.memory_space<vmem>>, %arg10: memref<1x4x256xf32, #tpu.memory_space<vmem>>) attributes {dimension_semantics = [#tpu.dimension_semantics<parallel>, #tpu.dimension_semantics<parallel>], iteration_bounds = array<i64: 2, 1>, scalar_prefetch = 0 : i64, scratch_operands = 0 : i64, tpu.core_type = #tpu.core_type<tc>, window_params = [{transform_indices = @transform_0, window_bounds = array<i64: 1, 4, 256>}, {pipeline_mode = #tpu.pipeline_mode<synchronous>, transform_indices = @transform_1, window_bounds = array<i64: 8, 4>}, {pipeline_mode = #tpu.pipeline_mode<synchronous>, transform_indices = @transform_2, window_bounds = array<i64: 8, 1>}, {pipeline_mode = #tpu.pipeline_mode<synchronous>, transform_indices = @transform_3, window_bounds = array<i64: 8, 1>}, {pipeline_mode = #tpu.pipeline_mode<synchronous>, transform_indices = @transform_4, window_bounds = array<i64: 4, 8>}, {pipeline_mode = #tpu.pipeline_mode<synchronous>, transform_indices = @transform_5, window_bounds = array<i64: 4, 1>}, {pipeline_mode = #tpu.pipeline_mode<synchronous>, transform_indices = @transform_6, window_bounds = array<i64: 4, 1>}, {transform_indices = @transform_7, window_bounds = array<i64: 1, 4, 1>}, {transform_indices = @transform_8, window_bounds = array<i64: 1, 4, 256>}]} {
    %c0 = arith.constant 0 : index
    %c0_0 = arith.constant 0 : index
    %c0_1 = arith.constant 0 : index
    %0 = vector.load %arg2[%c0, %c0_0, %c0_1] : memref<1x4x256xf32, #tpu.memory_space<vmem>>, vector<1x4x256xf32>
    %1 = vector.shape_cast %0 : vector<1x4x256xf32> to vector<4x256xf32>
    %c0_2 = arith.constant 0 : index
    %c0_3 = arith.constant 0 : index
    %2 = vector.load %arg3[%c0_2, %c0_3] : memref<8x4xf32, #tpu.memory_space<vmem>>, vector<8x4xf32>
    %cst = arith.constant dense<0.000000e+00> : vector<8x256xf32>
    %3 = tpu.matmul %2, %1, %cst {dimension_numbers = #tpu.dot_dimension_numbers<[1], [0], [0], [1], [0, 0, 1, 1], [], []>} : vector<8x4xf32>, vector<4x256xf32>, vector<8x256xf32> -> vector<8x256xf32>
    %c0_4 = arith.constant 0 : index
    %c0_5 = arith.constant 0 : index
    %4 = vector.load %arg4[%c0_4, %c0_5] : memref<8x1xf32, #tpu.memory_space<vmem>>, vector<8x1xf32>
    %5 = vector.broadcast %4 : vector<8x1xf32> to vector<8x256xf32>
    %6 = arith.mulf %3, %5 : vector<8x256xf32>
    %c0_6 = arith.constant 0 : index
    %c0_7 = arith.constant 0 : index
    %7 = vector.load %arg5[%c0_6, %c0_7] : memref<8x1xf32, #tpu.memory_space<vmem>>, vector<8x1xf32>
    %8 = vector.broadcast %7 : vector<8x1xf32> to vector<8x256xf32>
    %9 = arith.addf %6, %8 : vector<8x256xf32>
    %cst_8 = arith.constant 0.000000e+00 : f32
    %10 = vector.broadcast %cst_8 : f32 to vector<8x256xf32>
    %11 = arith.maximumf %9, %10 : vector<8x256xf32>
    %c0_9 = arith.constant 0 : index
    %c0_10 = arith.constant 0 : index
    %12 = vector.load %arg6[%c0_9, %c0_10] : memref<4x8xf32, #tpu.memory_space<vmem>>, vector<4x8xf32>
    %cst_11 = arith.constant dense<0.000000e+00> : vector<4x256xf32>
    %13 = tpu.matmul %12, %11, %cst_11 {dimension_numbers = #tpu.dot_dimension_numbers<[1], [0], [0], [1], [0, 0, 1, 1], [], []>} : vector<4x8xf32>, vector<8x256xf32>, vector<4x256xf32> -> vector<4x256xf32>
    %c0_12 = arith.constant 0 : index
    %c0_13 = arith.constant 0 : index
    %14 = vector.load %arg7[%c0_12, %c0_13] : memref<4x1xf32, #tpu.memory_space<vmem>>, vector<4x1xf32>
    %15 = vector.broadcast %14 : vector<4x1xf32> to vector<4x256xf32>
    %16 = arith.mulf %13, %15 : vector<4x256xf32>
    %c0_14 = arith.constant 0 : index
    %c0_15 = arith.constant 0 : index
    %17 = vector.load %arg8[%c0_14, %c0_15] : memref<4x1xf32, #tpu.memory_space<vmem>>, vector<4x1xf32>
    %18 = vector.broadcast %17 : vector<4x1xf32> to vector<4x256xf32>
    %19 = arith.addf %16, %18 : vector<4x256xf32>
    %c0_16 = arith.constant 0 : index
    %c0_17 = arith.constant 0 : index
    %c0_18 = arith.constant 0 : index
    %20 = vector.load %arg9[%c0_16, %c0_17, %c0_18] : memref<1x4x1xf32, #tpu.memory_space<vmem>>, vector<1x4x1xf32>
    %21 = vector.shape_cast %20 : vector<1x4x1xf32> to vector<4x1xf32>
    %22 = vector.broadcast %21 : vector<4x1xf32> to vector<4x256xf32>
    %23 = arith.addf %19, %22 : vector<4x256xf32>
    %24 = arith.negf %23 : vector<4x256xf32>
    %25 = math.exp %24 : vector<4x256xf32>
    %cst_19 = arith.constant 1.000000e+00 : f32
    %26 = vector.broadcast %cst_19 : f32 to vector<4x256xf32>
    %27 = arith.addf %26, %25 : vector<4x256xf32>
    %28 = arith.divf %26, %27 : vector<4x256xf32>
    %c0_20 = arith.constant 0 : index
    %c0_21 = arith.constant 0 : index
    %c0_22 = arith.constant 0 : index
    %29 = vector.load %arg10[%c0_20, %c0_21, %c0_22] : memref<1x4x256xf32, #tpu.memory_space<vmem>>, vector<1x4x256xf32>
    %30 = vector.shape_cast %29 : vector<1x4x256xf32> to vector<4x256xf32>
    %31 = vector.shape_cast %28 : vector<4x256xf32> to vector<1x4x256xf32>
    tpu.vector_store %arg10[%c0_20, %c0_21, %c0_22], %31 {strides = array<i32>} : memref<1x4x256xf32, #tpu.memory_space<vmem>>, vector<1x4x256xf32>,
    return
  }
  func.func @transform_0(%arg0: i32, %arg1: i32) -> (i32, i32, i32) {
    %c0_i32 = arith.constant 0 : i32
    %c0_i32_0 = arith.constant 0 : i32
    return %arg0, %c0_i32, %arg1 : i32, i32, i32
  }
  func.func @transform_1(%arg0: i32, %arg1: i32) -> (i32, i32) {
    %c0_i32 = arith.constant 0 : i32
    %c0_i32_0 = arith.constant 0 : i32
    %c0_i32_1 = arith.constant 0 : i32
    return %c0_i32, %c0_i32_0 : i32, i32
  }
  func.func @transform_2(%arg0: i32, %arg1: i32) -> (i32, i32) {
    %c0_i32 = arith.constant 0 : i32
    %c0_i32_0 = arith.constant 0 : i32
    %c0_i32_1 = arith.constant 0 : i32
    return %c0_i32, %c0_i32_0 : i32, i32
  }
  func.func @transform_3(%arg0: i32, %arg1: i32) -> (i32, i32) {
    %c0_i32 = arith.constant 0 : i32
    %c0_i32_0 = arith.constant 0 : i32
    %c0_i32_1 = arith.constant 0 : i32
    return %c0_i32, %c0_i32_0 : i32, i32
  }
  func.func @transform_4(%arg0: i32, %arg1: i32) -> (i32, i32) {
    %c0_i32 = arith.constant 0 : i32
    %c0_i32_0 = arith.constant 0 : i32
    %c0_i32_1 = arith.constant 0 : i32
    return %c0_i32, %c0_i32_0 : i32, i32
  }
  func.func @transform_5(%arg0: i32, %arg1: i32) -> (i32, i32) {
    %c0_i32 = arith.constant 0 : i32
    %c0_i32_0 = arith.constant 0 : i32
    %c0_i32_1 = arith.constant 0 : i32
    return %c0_i32, %c0_i32_0 : i32, i32
  }
  func.func @transform_6(%arg0: i32, %arg1: i32) -> (i32, i32) {
    %c0_i32 = arith.constant 0 : i32
    %c0_i32_0 = arith.constant 0 : i32
    %c0_i32_1 = arith.constant 0 : i32
    return %c0_i32, %c0_i32_0 : i32, i32
  }
  func.func @transform_7(%arg0: i32, %arg1: i32) -> (i32, i32, i32) {
    %c0_i32 = arith.constant 0 : i32
    %c0_i32_0 = arith.constant 0 : i32
    %c0_i32_1 = arith.constant 0 : i32
    return %arg0, %c0_i32, %c0_i32_0 : i32, i32, i32
  }
  func.func @transform_8(%arg0: i32, %arg1: i32) -> (i32, i32, i32) {
    %c0_i32 = arith.constant 0 : i32
    %c0_i32_0 = arith.constant 0 : i32
    return %arg0, %c0_i32, %arg1 : i32, i32, i32
  }
}

</mosaic_0001>

<llo_original>
// kernel: tpu_custom_call.1
$region0: #{tpu_custom_call.1}
  #allocation0 [shape = 'u32[]', space=smem, size = 0x4, offset = 0x4, fixed_abs, tag = 'smem constant byte address 0x4 - core index']
  #allocation1 [shape = 'u32[144,128]{1,0:T(1,128)}', space=vmem, size = 0x12000, scoped, tag = 'internal scratch']
  %s0 = inlined_call_operand.vmem [shape: f32[2,4,256], index: 0, kind: input, shape index: {}]
  %s1 = inlined_call_operand.vmem [shape: f32[8,4], index: 1, kind: input, shape index: {}]
  %s2 = inlined_call_operand.vmem [shape: f32[8,1], index: 2, kind: input, shape index: {}]
  %s3 = inlined_call_operand.vmem [shape: f32[8,1], index: 3, kind: input, shape index: {}]
  %s4 = inlined_call_operand.vmem [shape: f32[4,8], index: 4, kind: input, shape index: {}]
  %s5 = inlined_call_operand.vmem [shape: f32[4,1], index: 5, kind: input, shape index: {}]
  %s6 = inlined_call_operand.vmem [shape: f32[4,1], index: 6, kind: input, shape index: {}]
  %s7 = inlined_call_operand.vmem [shape: f32[2,4,1], index: 7, kind: input, shape index: {}]
  %s8 = inlined_call_operand.hbm [shape: f32[2,4,256], index: 8, kind: output, shape index: {}]
  %s9 = sld [smem:[#allocation0]]
  $region65: #{tpu_custom_call.1} parent=0
    _
  %s11 = ssub.s32 1, %s9
  %s12 = scalar_select 0, %s11, %s9
  $region1: #{tpu_custom_call.1} parent=0
    #allocation2 [shape = 'u8[8192]{0}', space=vmem, size = 0x2000, scoped, tag = 'output window, operand 0']
    #allocation3 [shape = 's32[2]{0}', space=sflag, size = 0x8, scoped, tag = 'scoped memory for tpu_custom_call.1']
    %13 = vsyncpa [#allocation3], 0
    %s14 = scalar_lea.sflag [#allocation3], 1
    %15 = vsyncpa %s14, 0
    loop: start=0, step=1, limit=4
    $region2: #{tpu_custom_call.1} parent=1 // loop_pre_header
      _
    $region3: #{tpu_custom_call.1} parent=1 // loop_header
      %s17 = sphi 0, %s21
      %p18 = scmp.ge.s32.totalorder %s17, 4
      %s24 = sphi 0, %s36
      %s25 = sphi 0, %s32
      %s26 = sphi 0, %s24
      %s27 = sphi 0, %s25
      %s28 = sphi 0, %s26
      %s29 = sphi 0, %s27
      %s41 = sphi 0, %s43
      %s44 = sphi 0, %s41
      %s45 = sphi 0, %s44
      %s61 = sphi 0, %s45
      %s65 = sphi 0, %s65
      %s67 = sphi 0, %s65
      %s68 = sphi 0, %s67
      %s82 = sphi 0, %s68
      %s86 = sphi 0, %s86
      %s88 = sphi 0, %s86
      %s89 = sphi 0, %s88
      %s103 = sphi 0, %s89
      %s107 = sphi 0, %s107
      %s109 = sphi 0, %s107
      %s110 = sphi 0, %s109
      %s124 = sphi 0, %s110
      %s128 = sphi 0, %s128
      %s130 = sphi 0, %s128
      %s131 = sphi 0, %s130
      %s145 = sphi 0, %s131
      %s149 = sphi 0, %s149
      %s151 = sphi 0, %s149
      %s152 = sphi 0, %s151
      %s166 = sphi 0, %s152
      %s170 = sphi 0, %s170
      %s172 = sphi 0, %s170
      %s173 = sphi 0, %s172
      %s187 = sphi 0, %s173
      %s193 = sphi 0, %s195
      %s196 = sphi 0, %s193
      %s197 = sphi 0, %s196
      %s213 = sphi 0, %s197
      %s221 = sphi 0, %s223
      %s224 = sphi 0, %s221
      %s225 = sphi 0, %s224
      %s241 = sphi 0, %s225
    $region4: #{tpu_custom_call.1} parent=1 // loop_header_branch
      %20 = sbr.rel (%p18) target = $region8
    $region5: #{tpu_custom_call.1} parent=1 // loop_body
      %s22 = ssub.s32 %s17, 1
      %s23 = ssub.s32 %s17, 2
      %s30 = sadd.s32 1, %s25
      %p31 = scmp.ge.s32.totalorder %s30, 1
      %s32 = scalar_select %p31, 0, %s30
      %s33 = sadd.s32 1, %s24
      %s34 = scalar_select %p31, %s33, %s24
      %p35 = scmp.ge.s32.totalorder %s34, 2
      %s36 = scalar_select %p35, 0, %s34
      %s37 = ssub.s32 %s24, %s36
      %s38 = ssub.s32 %s25, %s32
      %s39 = sor.u32 %s37, %s38
      %p40 = scmp.eq.s32.totalorder %s39, 0
      %s42 = sadd.s32 %s41, 1
      %s43 = scalar_select %p40, %s41, %s42
      %p46 = pneg %p40
      %p47 = scmp.eq.s32.totalorder %s17, 1
      %p48 = por %p46, %p47
      %p49 = scmp.ne.s32.totalorder %s41, %s44
      %p50 = scmp.eq.s32.totalorder %s17, 0
      %p51 = por %p49, %p50
      %p52 = scmp.ne.s32.totalorder %s41, %s44
      %p53 = scmp.eq.s32.totalorder %s22, 1
      %p54 = por %p52, %p53
      %p55 = scmp.ne.s32.totalorder %s44, %s45
      %p56 = scmp.eq.s32.totalorder %s22, 0
      %p57 = por %p55, %p56
      %p58 = scmp.ne.s32.totalorder %s44, %s45
      %p59 = scmp.eq.s32.totalorder %s23, 1
      %p60 = por %p58, %p59
      %p62 = scmp.ne.s32.totalorder %s45, %s61
      %p63 = scmp.eq.s32.totalorder %s23, 0
      %p64 = por %p62, %p63
      %s66 = sadd.s32 %s65, 1
      %p69 = scmp.eq.s32.totalorder %s17, 1
      %p70 = scmp.ne.s32.totalorder %s65, %s67
      %p71 = scmp.eq.s32.totalorder %s17, 0
      %p72 = por %p70, %p71
      %p73 = scmp.ne.s32.totalorder %s65, %s67
      %p74 = scmp.eq.s32.totalorder %s22, 1
      %p75 = por %p73, %p74
      %p76 = scmp.ne.s32.totalorder %s67, %s68
      %p77 = scmp.eq.s32.totalorder %s22, 0
      %p78 = por %p76, %p77
      %p79 = scmp.ne.s32.totalorder %s67, %s68
      %p80 = scmp.eq.s32.totalorder %s23, 1
      %p81 = por %p79, %p80
      %p83 = scmp.ne.s32.totalorder %s68, %s82
      %p84 = scmp.eq.s32.totalorder %s23, 0
      %p85 = por %p83, %p84
      %s87 = sadd.s32 %s86, 1
      %p90 = scmp.eq.s32.totalorder %s17, 1
      %p91 = scmp.ne.s32.totalorder %s86, %s88
      %p92 = scmp.eq.s32.totalorder %s17, 0
      %p93 = por %p91, %p92
      %p94 = scmp.ne.s32.totalorder %s86, %s88
      %p95 = scmp.eq.s32.totalorder %s22, 1
      %p96 = por %p94, %p95
      %p97 = scmp.ne.s32.totalorder %s88, %s89
      %p98 = scmp.eq.s32.totalorder %s22, 0
      %p99 = por %p97, %p98
      %p100 = scmp.ne.s32.totalorder %s88, %s89
      %p101 = scmp.eq.s32.totalorder %s23, 1
      %p102 = por %p100, %p101
      %p104 = scmp.ne.s32.totalorder %s89, %s103
      %p105 = scmp.eq.s32.totalorder %s23, 0
      %p106 = por %p104, %p105
      %s108 = sadd.s32 %s107, 1
      %p111 = scmp.eq.s32.totalorder %s17, 1
      %p112 = scmp.ne.s32.totalorder %s107, %s109
      %p113 = scmp.eq.s32.totalorder %s17, 0
      %p114 = por %p112, %p113
      %p115 = scmp.ne.s32.totalorder %s107, %s109
      %p116 = scmp.eq.s32.totalorder %s22, 1
      %p117 = por %p115, %p116
      %p118 = scmp.ne.s32.totalorder %s109, %s110
      %p119 = scmp.eq.s32.totalorder %s22, 0
      %p120 = por %p118, %p119
      %p121 = scmp.ne.s32.totalorder %s109, %s110
      %p122 = scmp.eq.s32.totalorder %s23, 1
      %p123 = por %p121, %p122
      %p125 = scmp.ne.s32.totalorder %s110, %s124
      %p126 = scmp.eq.s32.totalorder %s23, 0
      %p127 = por %p125, %p126
      %s129 = sadd.s32 %s128, 1
      %p132 = scmp.eq.s32.totalorder %s17, 1
      %p133 = scmp.ne.s32.totalorder %s128, %s130
      %p134 = scmp.eq.s32.totalorder %s17, 0
      %p135 = por %p133, %p134
      %p136 = scmp.ne.s32.totalorder %s128, %s130
      %p137 = scmp.eq.s32.totalorder %s22, 1
      %p138 = por %p136, %p137
      %p139 = scmp.ne.s32.totalorder %s130, %s131
      %p140 = scmp.eq.s32.totalorder %s22, 0
      %p141 = por %p139, %p140
      %p142 = scmp.ne.s32.totalorder %s130, %s131
      %p143 = scmp.eq.s32.totalorder %s23, 1
      %p144 = por %p142, %p143
      %p146 = scmp.ne.s32.totalorder %s131, %s145
      %p147 = scmp.eq.s32.totalorder %s23, 0
      %p148 = por %p146, %p147
      %s150 = sadd.s32 %s149, 1
      %p153 = scmp.eq.s32.totalorder %s17, 1
      %p154 = scmp.ne.s32.totalorder %s149, %s151
      %p155 = scmp.eq.s32.totalorder %s17, 0
      %p156 = por %p154, %p155
      %p157 = scmp.ne.s32.totalorder %s149, %s151
      %p158 = scmp.eq.s32.totalorder %s22, 1
      %p159 = por %p157, %p158
      %p160 = scmp.ne.s32.totalorder %s151, %s152
      %p161 = scmp.eq.s32.totalorder %s22, 0
      %p162 = por %p160, %p161
      %p163 = scmp.ne.s32.totalorder %s151, %s152
      %p164 = scmp.eq.s32.totalorder %s23, 1
      %p165 = por %p163, %p164
      %p167 = scmp.ne.s32.totalorder %s152, %s166
      %p168 = scmp.eq.s32.totalorder %s23, 0
      %p169 = por %p167, %p168
      %s171 = sadd.s32 %s170, 1
      %p174 = scmp.eq.s32.totalorder %s17, 1
      %p175 = scmp.ne.s32.totalorder %s170, %s172
      %p176 = scmp.eq.s32.totalorder %s17, 0
      %p177 = por %p175, %p176
      %p178 = scmp.ne.s32.totalorder %s170, %s172
      %p179 = scmp.eq.s32.totalorder %s22, 1
      %p180 = por %p178, %p179
      %p181 = scmp.ne.s32.totalorder %s172, %s173
      %p182 = scmp.eq.s32.totalorder %s22, 0
      %p183 = por %p181, %p182
      %p184 = scmp.ne.s32.totalorder %s172, %s173
      %p185 = scmp.eq.s32.totalorder %s23, 1
      %p186 = por %p184, %p185
      %p188 = scmp.ne.s32.totalorder %s173, %s187
      %p189 = scmp.eq.s32.totalorder %s23, 0
      %p190 = por %p188, %p189
      %s191 = ssub.s32 %s24, %s36
      %p192 = scmp.eq.s32.totalorder %s191, 0
      %s194 = sadd.s32 %s193, 1
      %s195 = scalar_select %p192, %s193, %s194
      %p198 = pneg %p192
      %p199 = scmp.eq.s32.totalorder %s17, 1
      %p200 = por %p198, %p199
      %p201 = scmp.ne.s32.totalorder %s193, %s196
      %p202 = scmp.eq.s32.totalorder %s17, 0
      %p203 = por %p201, %p202
      %p204 = scmp.ne.s32.totalorder %s193, %s196
      %p205 = scmp.eq.s32.totalorder %s22, 1
      %p206 = por %p204, %p205
      %p207 = scmp.ne.s32.totalorder %s196, %s197
      %p208 = scmp.eq.s32.totalorder %s22, 0
      %p209 = por %p207, %p208
      %p210 = scmp.ne.s32.totalorder %s196, %s197
      %p211 = scmp.eq.s32.totalorder %s23, 1
      %p212 = por %p210, %p211
      %p214 = scmp.ne.s32.totalorder %s197, %s213
      %p215 = scmp.eq.s32.totalorder %s23, 0
      %p216 = por %p214, %p215
      %s217 = ssub.s32 %s24, %s36
      %s218 = ssub.s32 %s25, %s32
      %s219 = sor.u32 %s217, %s218
      %p220 = scmp.eq.s32.totalorder %s219, 0
      %s222 = sadd.s32 %s221, 1
      %s223 = scalar_select %p220, %s221, %s222
      %p226 = pneg %p220
      %p227 = scmp.eq.s32.totalorder %s17, 1
      %p228 = por %p226, %p227
      %p229 = scmp.ne.s32.totalorder %s221, %s224
      %p230 = scmp.eq.s32.totalorder %s17, 0
      %p231 = por %p229, %p230
      %p232 = scmp.ne.s32.totalorder %s221, %s224
      %p233 = scmp.eq.s32.totalorder %s22, 1
      %p234 = por %p232, %p233
      %p235 = scmp.ne.s32.totalorder %s224, %s225
      %p236 = scmp.eq.s32.totalorder %s22, 0
      %p237 = por %p235, %p236
      %p238 = scmp.ne.s32.totalorder %s224, %s225
      %p239 = scmp.eq.s32.totalorder %s23, 1
      %p240 = por %p238, %p239
      %p242 = scmp.ne.s32.totalorder %s225, %s241
      %p243 = scmp.eq.s32.totalorder %s23, 0
      %p244 = por %p242, %p243
      %p245 = scmp.le.s32.totalorder 1, %s17
      %p246 = scmp.lt.s32.totalorder %s17, 3
      %p247 = pnand %p245, %p246
      %p248 = pneg %p247
      // Predicated region
      $region9: #{tpu_custom_call.1} parent=5 // pred_check
        _
      $region10: #{tpu_custom_call.1} parent=5 // pred_check_branch
        %250 = sbr.rel (%p247) target = $region12
      $region11: #{tpu_custom_call.1} parent=5 // pred_region
        %s251 = ssub.s32 %s17, 1
        // Predicated region
        $region13: #{tpu_custom_call.1} parent=11 // pred_check
          %p252 = pneg %p78
        $region14: #{tpu_custom_call.1} parent=11 // pred_check_branch
          %254 = sbr.rel (%p252) target = $region16
        $region15: #{tpu_custom_call.1} parent=11 // pred_region
          _
        $region16: #{tpu_custom_call.1} parent=11 // pred_fallthru
          _
        // Predicated region
        $region17: #{tpu_custom_call.1} parent=11 // pred_check
          %p255 = pneg %p99
        $region18: #{tpu_custom_call.1} parent=11 // pred_check_branch
          %257 = sbr.rel (%p255) target = $region20
        $region19: #{tpu_custom_call.1} parent=11 // pred_region
          _
        $region20: #{tpu_custom_call.1} parent=11 // pred_fallthru
          _
        // Predicated region
        $region21: #{tpu_custom_call.1} parent=11 // pred_check
          %p258 = pneg %p120
        $region22: #{tpu_custom_call.1} parent=11 // pred_check_branch
          %260 = sbr.rel (%p258) target = $region24
        $region23: #{tpu_custom_call.1} parent=11 // pred_region
          _
        $region24: #{tpu_custom_call.1} parent=11 // pred_fallthru
          _
        // Predicated region
        $region25: #{tpu_custom_call.1} parent=11 // pred_check
          %p261 = pneg %p141
        $region26: #{tpu_custom_call.1} parent=11 // pred_check_branch
          %263 = sbr.rel (%p261) target = $region28
        $region27: #{tpu_custom_call.1} parent=11 // pred_region
          _
        $region28: #{tpu_custom_call.1} parent=11 // pred_fallthru
          _
        // Predicated region
        $region29: #{tpu_custom_call.1} parent=11 // pred_check
          %p264 = pneg %p162
        $region30: #{tpu_custom_call.1} parent=11 // pred_check_branch
          %266 = sbr.rel (%p264) target = $region32
        $region31: #{tpu_custom_call.1} parent=11 // pred_region
          _
        $region32: #{tpu_custom_call.1} parent=11 // pred_fallthru
          _
        // Predicated region
        $region33: #{tpu_custom_call.1} parent=11 // pred_check
          %p267 = pneg %p183
        $region34: #{tpu_custom_call.1} parent=11 // pred_check_branch
          %269 = sbr.rel (%p267) target = $region36
        $region35: #{tpu_custom_call.1} parent=11 // pred_region
          _
        $region36: #{tpu_custom_call.1} parent=11 // pred_fallthru
          _
      $region12: #{tpu_custom_call.1} parent=5 // pred_fallthru
        _
      %p270 = scmp.lt.s32.totalorder %s17, 2
      // Predicated region
      $region37: #{tpu_custom_call.1} parent=5 // pred_check
        %p271 = pneg %p270
      $region38: #{tpu_custom_call.1} parent=5 // pred_check_branch
        %273 = sbr.rel (%p271) target = $region40
      $region39: #{tpu_custom_call.1} parent=5 // pred_region
        // Predicated region
        $region41: #{tpu_custom_call.1} parent=39 // pred_check
          %p274 = pneg %p51
        $region42: #{tpu_custom_call.1} parent=39 // pred_check_branch
          %276 = sbr.rel (%p274) target = $region44
        $region43: #{tpu_custom_call.1} parent=39 // pred_region
          %s277 = smul.u32 2, %s25
          %p278 = scmp.lt.s32.totalorder %s24, 1
          %s279 = scalar_select %p278, %s24, 1
          %p280 = scmp.lt.s32.totalorder %s277, 1
          %s281 = scalar_select %p280, %s277, 1
          %s282 = smul.addr %s279, 2
          %s283 = sadd.s32 %s281, %s282
          %s284 = smul.addr %s283, 4
          %s285 = scalar_lea.vmem %s0, %s284
          %s286 = smul.u32 2, %s25
        $region44: #{tpu_custom_call.1} parent=39 // pred_fallthru
          _
        // Predicated region
        $region45: #{tpu_custom_call.1} parent=39 // pred_check
          %p287 = pneg %p203
        $region46: #{tpu_custom_call.1} parent=39 // pred_check_branch
          %289 = sbr.rel (%p287) target = $region48
        $region47: #{tpu_custom_call.1} parent=39 // pred_region
          %p290 = scmp.lt.s32.totalorder %s24, 1
          %s291 = scalar_select %p290, %s24, 1
          %s292 = smul.addr %s291, 4
          %s293 = scalar_lea.vmem %s7, %s292
        $region48: #{tpu_custom_call.1} parent=39 // pred_fallthru
          _
      $region40: #{tpu_custom_call.1} parent=5 // pred_fallthru
        _
      %p294 = scmp.le.s32.totalorder 1, %s17
      %p295 = scmp.lt.s32.totalorder %s17, 3
      %p296 = pnand %p294, %p295
      %p297 = pneg %p296
      // Predicated region
      $region49: #{tpu_custom_call.1} parent=5 // pred_check
        _
      $region50: #{tpu_custom_call.1} parent=5 // pred_check_branch
        %299 = sbr.rel (%p296) target = $region52
      $region51: #{tpu_custom_call.1} parent=5 // pred_region
        %s300 = ssub.s32 %s17, 1
        %s301 = smul.u32 2, %s27
        %p302 = scmp.lt.s32.totalorder %s26, 1
        %s303 = scalar_select %p302, %s26, 1
        %p304 = scmp.lt.s32.totalorder %s301, 1
        %s305 = scalar_select %p304, %s301, 1
        %s306 = smul.addr %s303, 2
        %s307 = sadd.s32 %s305, %s306
        %s308 = smul.addr %s307, 4
        %s309 = scalar_lea.vmem %s0, %s308
        %p310 = pneg %p57
        %p311 = pneg %p54
        %p312 = pneg %p78
        %p313 = pneg %p75
        %p314 = pneg %p99
        %p315 = pneg %p96
        %p316 = pneg %p120
        %p317 = pneg %p117
        %p318 = pneg %p141
        %p319 = pneg %p138
        %p320 = pneg %p162
        %p321 = pneg %p159
        %p322 = pneg %p183
        %p323 = pneg %p180
        %p324 = scmp.lt.s32.totalorder %s26, 1
        %s325 = scalar_select %p324, %s26, 1
        %s326 = smul.addr %s325, 4
        %s327 = scalar_lea.vmem %s7, %s326
        %p328 = pneg %p209
        %p329 = pneg %p206
        %p330 = pneg %p237
        %p331 = pneg %p234
        %s332 = sand.u32 %s224, 1
        %s333 = scalar_lea.sflag [#allocation3], %s332
        %s334 = sand.u32 %s224, 1
        %s335 = smul.addr %s334, 8
        %s336 = scalar_lea.vmem [#allocation2], %s335
        %s337 = smul.u32 2, %s27
        %p338 = scmp.lt.s32.totalorder %s26, 1
        %s339 = scalar_select %p338, %s26, 1
        %p340 = scmp.lt.s32.totalorder %s337, 1
        %s341 = scalar_select %p340, %s337, 1
        %s342 = smul.addr %s339, 2
        %s343 = sadd.s32 %s341, %s342
        %s344 = smul.addr %s343, 4
        %s345 = scalar_lea.vmem %s0, %s344
        %s346 = smul.u32 2, %s27
        %p347 = scmp.lt.s32.totalorder %s26, 1
        %s348 = scalar_select %p347, %s26, 1
        %s349 = smul.addr %s348, 4
        %s350 = scalar_lea.vmem %s7, %s349
        %s351 = smul.u32 2, %s27
        %v352 = vld [vmem:[%s345] sm:$0xff]
        %v353 = vld [vmem:[%s1] sm:$0xff]
        %v355 = vcombine.high %v352, %v352
        %vm356 = vcmask 31744
        %v358 = vsel %vm356, %v353, 0
        %vm360 = vcmask 1043456
        %v361 = vsel %vm360, %v352, 0
        %v363 = vsel %vm360, %v355, 0
        %365 = vmatprep.subr.mxu0 %v363
        %366 = vmatpush1.msra.mxu0 %v361
        %367 = vmatprep.subr.mxu0 0.0
        %368 = vmatpush1.msra.mxu0 0.0
        %369 = vmatprep.subr.mxu0 0.0
        %370 = vmatpush1.msra.mxu0 0.0
        %371 = vmatprep.subr.mxu0 0.0
        %372 = vmatpush1.msra.mxu0 0.0
        %373 = vmatprep.subr.mxu0 0.0
        %374 = vmatpush1.msra.mxu0 0.0
        %375 = vmatprep.subr.mxu0 0.0
        %376 = vmatpush1.msra.mxu0 0.0
        %377 = vmatprep.subr.mxu0 0.0
        %378 = vmatpush1.msra.mxu0 0.0
        %379 = vmatprep.subr.mxu0 0.0
        %380 = vmatpush1.msra.mxu0 0.0
        %381 = vmatprep.subr.mxu0 0.0
        %382 = vmatpush1.msra.mxu0 0.0
        %383 = vmatprep.subr.mxu0 0.0
        %384 = vmatpush1.msra.mxu0 0.0
        %385 = vmatprep.subr.mxu0 0.0
        %386 = vmatpush1.msra.mxu0 0.0
        %387 = vmatprep.subr.mxu0 0.0
        %388 = vmatpush1.msra.mxu0 0.0
        %389 = vmatprep.subr.mxu0 0.0
        %390 = vmatpush1.msra.mxu0 0.0
        %391 = vmatprep.subr.mxu0 0.0
        %392 = vmatpush1.msra.mxu0 0.0
        %393 = vmatprep.subr.mxu0 0.0
        %394 = vmatpush1.msra.mxu0 0.0
        %395 = vmatprep.subr.mxu0 0.0
        %396 = vmatpush1.msra.mxu0 0.0
        %397 = vmatprep.subr.mxu0 0.0
        %398 = vmatpush1.msra.mxu0 0.0
        %399 = vmatprep.subr.mxu0 0.0
        %400 = vmatpush1.msra.mxu0 0.0
        %401 = vmatprep.subr.mxu0 0.0
        %402 = vmatpush1.msra.mxu0 0.0
        %403 = vmatprep.subr.mxu0 0.0
        %404 = vmatpush1.msra.mxu0 0.0
        %405 = vmatprep.subr.mxu0 0.0
        %406 = vmatpush1.msra.mxu0 0.0
        %407 = vmatprep.subr.mxu0 0.0
        %408 = vmatpush1.msra.mxu0 0.0
        %409 = vmatprep.subr.mxu0 0.0
        %410 = vmatpush1.msra.mxu0 0.0
        %411 = vmatprep.subr.mxu0 0.0
        %412 = vmatpush1.msra.mxu0 0.0
        %413 = vmatprep.subr.mxu0 0.0
        %414 = vmatpush1.msra.mxu0 0.0
        %415 = vmatprep.subr.mxu0 0.0
        %416 = vmatpush1.msra.mxu0 0.0
        %417 = vmatprep.subr.mxu0 0.0
        %418 = vmatpush1.msra.mxu0 0.0
        %419 = vmatprep.subr.mxu0 0.0
        %420 = vmatpush1.msra.mxu0 0.0
        %421 = vmatprep.subr.mxu0 0.0
        %422 = vmatpush1.msra.mxu0 0.0
        %423 = vmatprep.subr.mxu0 0.0
        %424 = vmatpush1.msra.mxu0 0.0
        %425 = vmatprep.subr.mxu0 0.0
        %426 = vmatpush1.msra.mxu0 0.0
        %427 = vmatprep.subr.mxu0 0.0
        %428 = vmatpush1.msra.mxu0 0.0
        %429 = vmatprep.mubr.f32.mxu0 0.0
        %430 = vmatmul.mubr.f32.gmra.mrb[0].mxu0 %v358
        %v431 = vpop.f32.mrb[0].mxu0
        %v432 = vadd.f32 0.0, %v431
        %v433 = vpop.f32.mrb[0].mxu0
        %v434 = vadd.f32 0.0, %v433
        %435 = vdwg.mxu0
        %v436 = vld [vmem:[%s2] sm:$0xff]
        %438 = vset.pattern.permute.xlu0 0
        %439 = vperm.xlu0 %438, %v436
        %v440 = vpop.permute.xlu0 %439
        %v442 = vmul.f32 %v432, %v440
        %v443 = vmul.f32 %v434, %v440
        %v444 = vld [vmem:[%s3] sm:$0xff]
        %446 = vset.pattern.permute.xlu0 0
        %447 = vperm.xlu0 %446, %v444
        %v448 = vpop.permute.xlu0 %447
        %v450 = vadd.f32 %v442, %v448
        %v451 = vadd.f32 %v443, %v448
        %v452 = vmax.f32 %v450, 0.0
        %v453 = vmax.f32 %v451, 0.0
        %v454 = vld [vmem:[%s4] sm:$0xf]
        %vm455 = vcmask 64512
        %v457 = vsel %vm455, %v454, 0
        %459 = vmatprep.subr.mxu0 %v453
        %460 = vmatpush1.msra.mxu0 %v452
        %461 = vmatprep.subr.mxu0 0.0
        %462 = vmatpush1.msra.mxu0 0.0
        %463 = vmatprep.subr.mxu0 0.0
        %464 = vmatpush1.msra.mxu0 0.0
        %465 = vmatprep.subr.mxu0 0.0
        %466 = vmatpush1.msra.mxu0 0.0
        %467 = vmatprep.subr.mxu0 0.0
        %468 = vmatpush1.msra.mxu0 0.0
        %469 = vmatprep.subr.mxu0 0.0
        %470 = vmatpush1.msra.mxu0 0.0
        %471 = vmatprep.subr.mxu0 0.0
        %472 = vmatpush1.msra.mxu0 0.0
        %473 = vmatprep.subr.mxu0 0.0
        %474 = vmatpush1.msra.mxu0 0.0
        %475 = vmatprep.subr.mxu0 0.0
        %476 = vmatpush1.msra.mxu0 0.0
        %477 = vmatprep.subr.mxu0 0.0
        %478 = vmatpush1.msra.mxu0 0.0
        %479 = vmatprep.subr.mxu0 0.0
        %480 = vmatpush1.msra.mxu0 0.0
        %481 = vmatprep.subr.mxu0 0.0
        %482 = vmatpush1.msra.mxu0 0.0
        %483 = vmatprep.subr.mxu0 0.0
        %484 = vmatpush1.msra.mxu0 0.0
        %485 = vmatprep.subr.mxu0 0.0
        %486 = vmatpush1.msra.mxu0 0.0
        %487 = vmatprep.subr.mxu0 0.0
        %488 = vmatpush1.msra.mxu0 0.0
        %489 = vmatprep.subr.mxu0 0.0
        %490 = vmatpush1.msra.mxu0 0.0
        %491 = vmatprep.subr.mxu0 0.0
        %492 = vmatpush1.msra.mxu0 0.0
        %493 = vmatprep.subr.mxu0 0.0
        %494 = vmatpush1.msra.mxu0 0.0
        %495 = vmatprep.subr.mxu0 0.0
        %496 = vmatpush1.msra.mxu0 0.0
        %497 = vmatprep.subr.mxu0 0.0
        %498 = vmatpush1.msra.mxu0 0.0
        %499 = vmatprep.subr.mxu0 0.0
        %500 = vmatpush1.msra.mxu0 0.0
        %501 = vmatprep.subr.mxu0 0.0
        %502 = vmatpush1.msra.mxu0 0.0
        %503 = vmatprep.subr.mxu0 0.0
        %504 = vmatpush1.msra.mxu0 0.0
        %505 = vmatprep.subr.mxu0 0.0
        %506 = vmatpush1.msra.mxu0 0.0
        %507 = vmatprep.subr.mxu0 0.0
        %508 = vmatpush1.msra.mxu0 0.0
        %509 = vmatprep.subr.mxu0 0.0
        %510 = vmatpush1.msra.mxu0 0.0
        %511 = vmatprep.subr.mxu0 0.0
        %512 = vmatpush1.msra.mxu0 0.0
        %513 = vmatprep.subr.mxu0 0.0
        %514 = vmatpush1.msra.mxu0 0.0
        %515 = vmatprep.subr.mxu0 0.0
        %516 = vmatpush1.msra.mxu0 0.0
        %517 = vmatprep.subr.mxu0 0.0
        %518 = vmatpush1.msra.mxu0 0.0
        %519 = vmatprep.subr.mxu0 0.0
        %520 = vmatpush1.msra.mxu0 0.0
        %521 = vmatprep.subr.mxu0 0.0
        %522 = vmatpush1.msra.mxu0 0.0
        %523 = vmatprep.mubr.f32.mxu0 0.0
        %524 = vmatmul.mubr.f32.gmra.mrb[0].mxu0 %v457
        %v525 = vpop.f32.mrb[0].mxu0
        %v526 = vadd.f32 0.0, %v525
        %v527 = vpop.f32.mrb[0].mxu0
        %v528 = vadd.f32 0.0, %v527
        %529 = vdwg.mxu0
        %v530 = vld [vmem:[%s5] sm:$0xf]
        %532 = vset.pattern.permute.xlu0 0
        %533 = vperm.xlu0 %532, %v530
        %v534 = vpop.permute.xlu0 %533
        %v536 = vmul.f32 %v526, %v534
        %v537 = vmul.f32 %v528, %v534
        %v538 = vld [vmem:[%s6] sm:$0xf]
        %540 = vset.pattern.permute.xlu0 0
        %541 = vperm.xlu0 %540, %v538
        %v542 = vpop.permute.xlu0 %541
        %v544 = vadd.f32 %v536, %v542
        %v545 = vadd.f32 %v537, %v542
        %v546 = vld [vmem:[%s350] sm:$0xf]
        %548 = vset.pattern.permute.xlu0 0
        %549 = vperm.xlu0 %548, %v546
        %v550 = vpop.permute.xlu0 %549
        %v552 = vadd.f32 %v544, %v550
        %v553 = vadd.f32 %v545, %v550
        %v554 = vxor.u32 %v552, 2147483648
        %v555 = vxor.u32 %v553, 2147483648
        %v556 = vmul.f32 %v554, 1.442695
        %v557 = vpow.pop %v556
        %v558 = vmul.f32 %v555, 1.442695
        %v559 = vpow.pop %v558
        %v560 = vadd.f32 %v557, 1.0
        %v561 = vadd.f32 %v559, 1.0
        %v562 = vrcp.pop %v560
        %v563 = vmul.f32 1.0, %v562
        %v564 = vrcp.pop %v561
        %v565 = vmul.f32 1.0, %v564
        %v568 = vcombine.low %v563, %v565
        %570 = vst [vmem:[%s336] sm:$0xff] %v568
        %s571 = sand.u32 %s224, 1
        %s572 = scalar_lea.sflag [#allocation3], %s571
        %s573 = sand.u32 %s224, 1
        %s574 = smul.addr %s573, 8
        %s575 = scalar_lea.vmem [#allocation2], %s574
        // Predicated region
        $region53: #{tpu_custom_call.1} parent=51 // pred_check
          %p576 = pneg %p234
        $region54: #{tpu_custom_call.1} parent=51 // pred_check_branch
          %578 = sbr.rel (%p576) target = $region56
        $region55: #{tpu_custom_call.1} parent=51 // pred_region
          %s579 = smul.u32 2, %s27
          %s581 = ssub.s32 128, 128
          %582 = vsyncadd %s572, %s581
          %s583 = smul.addr %s26, 2
          %s584 = sadd.s32 %s579, %s583
          %s585 = smul.addr %s584, 64
          %s586 = scalar_lea.hbm %s8, %s585
          %s588 = sshll.u32 %s575, 4
          %s589 = int_to_ptr.vmem [resolvable:$true] %s588
          %591 = dma.vmem_to_hbm [thread:$0]  %s589, 128, %s586, %s572
        $region56: #{tpu_custom_call.1} parent=51 // pred_fallthru
          _
      $region52: #{tpu_custom_call.1} parent=5 // pred_fallthru
        _
      %p592 = scmp.le.s32.totalorder 2, %s17
      // Predicated region
      $region57: #{tpu_custom_call.1} parent=5 // pred_check
        %p593 = pneg %p592
      $region58: #{tpu_custom_call.1} parent=5 // pred_check_branch
        %595 = sbr.rel (%p593) target = $region60
      $region59: #{tpu_custom_call.1} parent=5 // pred_region
        %s596 = ssub.s32 %s17, 2
        // Predicated region
        $region61: #{tpu_custom_call.1} parent=59 // pred_check
          %p597 = pneg %p240
        $region62: #{tpu_custom_call.1} parent=59 // pred_check_branch
          %599 = sbr.rel (%p597) target = $region64
        $region63: #{tpu_custom_call.1} parent=59 // pred_region
          %s600 = sand.u32 %s225, 1
          %s601 = scalar_lea.sflag [#allocation3], %s600
          %s602 = sand.u32 %s225, 1
          %s603 = smul.addr %s602, 8
          %s604 = scalar_lea.vmem [#allocation2], %s603
          %605 = dma.done %s601, 128
        $region64: #{tpu_custom_call.1} parent=59 // pred_fallthru
          _
      $region60: #{tpu_custom_call.1} parent=5 // pred_fallthru
        _
    $region6: #{tpu_custom_call.1} parent=1 // loop_footer
      %s21 = sadd.s32 1, %s17
    $region7: #{tpu_custom_call.1} parent=1 // loop_footer_branch
      %16 = sbr.rel target = $region3
    $region8: #{tpu_custom_call.1} parent=1 // loop_exit
      _
    %606 = vsyncpa [#allocation3], 1
    %s607 = scalar_lea.sflag [#allocation3], 1
    %608 = vsyncpa %s607, 1

</llo_original>
